<compile_context>
chip_gen: v6e
topology: v6e:2x2x1
jax: 0.10.0
libtpu: 0.0.40
codegen_flags: <defaults>
</compile_context>

<pallas_src>
import functools

import jax
import jax.numpy as jnp
from jax.experimental import pallas as pl
from jax.experimental.pallas import tpu as pltpu


def _round_up(a, b):
    return (a + b - 1) // b * b


def _img_embedder_kernel(x_ref, w_ref, bias_ref, o_ref):
    # x_ref:    (tm, K)   input rows, original dtype (cast to bf16 on the fly)
    # w_ref:    (K, tn)   folded (lora_B.weight @ lora_A.weight)^T, bf16
    # bias_ref: (1, tn)   lora_B.bias, f32
    # o_ref:    (tm, tn)  output tile, original dtype
    y = jnp.dot(
        x_ref[...].astype(jnp.bfloat16),
        w_ref[...],
        preferred_element_type=jnp.float32,
    )
    o_ref[...] = (y + bias_ref[...]).astype(o_ref.dtype)


@functools.partial(jax.jit, static_argnames=("tm", "tn"))
def img_embedder_forward(x, a_weight, b_weight, b_bias, *, tm=None, tn=None):
    """x: [..., in_ch]; a_weight: [in_ch, in_ch]; b_weight: [out_ch, in_ch];
    b_bias: [out_ch].  Returns [..., out_ch] in x.dtype."""
    orig_dtype = x.dtype
    in_ch = a_weight.shape[0]
    out_ch = b_weight.shape[0]
    assert a_weight.shape == (in_ch, in_ch)
    assert b_weight.shape == (out_ch, in_ch)
    assert out_ch % 128 == 0, "out_channels must be a multiple of 128"
    # in_ch not a multiple of 128 is legal (block == full dim) but wastes
    # lanes; the module default (128) is already lane-aligned.

    lead = x.shape[:-1]
    m = 1
    for d in lead:
        m *= d
    x2d = x.reshape(m, in_ch)
    itemsize = jnp.dtype(orig_dtype).itemsize

    # ---- tile selection ---------------------------------------------------
    # Column tile: lane-dense, divides out_ch (full out_ch when small).
    if tn is None:
        if out_ch <= 512:
            tn = out_ch
        else:
            tn = 512
            while out_ch % tn:
                tn -= 128
    assert tn % 128 == 0 and out_ch % tn == 0

    def _vmem_bytes(tm_):
        # double-buffered x and out tiles + double-buffered W column tile + bias
        return (2 * tm_ * in_ch * itemsize
                + 2 * tm_ * tn * itemsize
                + 2 * in_ch * tn * 2
                + 2 * tn * 4)

    # Row tile: as large as the VMEM budget allows (the kernel is HBM-bound,
    # so big tiles amortize the ~0.35 us per-grid-step overhead), stepped in
    # multiples of 256 (MXU pass depth on v6e/v7x, 128-granular for v5e).
    if tm is None:
        if m < 8:
            tm = m                         # block == full array dim (allowed)
        else:
            budget = 12 * 1024 * 1024      # fits v5e's 16 MiB scoped default
            tm = 2048
            while tm > 256 and _vmem_bytes(tm) > budget:
                tm -= 256
            if m > 256:
                # keep >= 2 row tiles so v7x's two TensorCores both get work
                tm = min(tm, _round_up(pl.cdiv(m, 2), 256))
            tm = min(tm, (m // 8) * 8)     # tm <= m, multiple of 8
    assert tm == m or tm % 8 == 0

    grid = (pl.cdiv(m, tm), out_ch // tn)

    # ---- one-time weight prep ----------------------------------------------
    # Exact fold: x @ A^T @ B^T == x @ (B @ A)^T.  Done in f32, cast to bf16.
    w_folded = jnp.dot(
        b_weight.astype(jnp.float32),
        a_weight.astype(jnp.float32),
        preferred_element_type=jnp.float32,
    )                                                        # [N, K]
    w_t = w_folded.T.astype(jnp.bfloat16)                    # [K, N]
    bias2d = b_bias.astype(jnp.float32).reshape(1, out_ch)   # [1, N]

    cost = pl.CostEstimate(
        flops=2 * m * in_ch * out_ch,
        transcendentals=0,
        bytes_accessed=(
            m * in_ch * itemsize       # x
            + in_ch * out_ch * 2       # folded W (bf16)
            + out_ch * 4               # bias (f32)
            + m * out_ch * itemsize    # out
        ),
    )

    out = pl.pallas_call(
        _img_embedder_kernel,
        out_shape=jax.ShapeDtypeStruct((m, out_ch), orig_dtype),
        grid_spec=pltpu.PrefetchScalarGridSpec(
            num_scalar_prefetch=0,
            grid=grid,
            in_specs=[
                pl.BlockSpec((tm, in_ch), lambda i, j: (i, 0)),   # x rows
                pl.BlockSpec((in_ch, tn), lambda i, j: (0, j)),   # W cols
                pl.BlockSpec((1, tn), lambda i, j: (0, j)),       # bias cols
            ],
            out_specs=pl.BlockSpec((tm, tn), lambda i, j: (i, j)),
        ),
        compiler_params=pltpu.CompilerParams(
            # No accumulator / reduction axis: every grid point is independent.
            dimension_semantics=("parallel", "parallel"),
            vmem_limit_bytes=32 * 1024 * 1024,
        ),
        cost_estimate=cost,
    )(x2d, w_t, bias2d)

    return out.reshape(*lead, out_ch)


def _reference(x, a_weight, b_weight, b_bias):
    xf = x.astype(jnp.float32)
    h = xf @ a_weight.astype(jnp.float32).T
    y = h @ b_weight.astype(jnp.float32).T + b_bias.astype(jnp.float32)
    return y.astype(x.dtype)


if __name__ == "__main__":
    # Small shapes consistent with the module defaults:
    # in_channels=128, out_channels=3072, batch=2, seq=8.
    batch, seq, in_ch, out_ch = 2, 8, 128, 3072

    key = jax.random.PRNGKey(0)
    kx, ka, kb, kbias = jax.random.split(key, 4)

    # Deterministic synthetic parameters (shapes match torch.nn.Linear weights).
    a_weight = jax.random.normal(ka, (in_ch, in_ch), dtype=jnp.float32) * 0.02
    b_weight = jax.random.normal(kb, (out_ch, in_ch), dtype=jnp.float32) * 0.02
    b_bias = jax.random.normal(kbias, (out_ch,), dtype=jnp.float32) * 0.01

    # Input in a "model" dtype; kernel computes on the MXU with bf16 operands
    # and f32 accumulation and casts the result back to the original dtype.
    x = jax.random.normal(kx, (batch, seq, in_ch), dtype=jnp.float32).astype(
        jnp.bfloat16)

    out = img_embedder_forward(x, a_weight, b_weight, b_bias)
    out = jax.block_until_ready(out)

    ref = _reference(x, a_weight, b_weight, b_bias)
    assert out.shape == (batch, seq, out_ch)
    assert out.dtype == x.dtype
    err = jnp.max(jnp.abs(out.astype(jnp.float32) - ref.astype(jnp.float32)))
    assert float(err) < 5e-2, f"max abs err {err}"

    print("KERNEL_OK")
</pallas_src>

<mosaic_0001>
module attributes {stable_mosaic.version = 11 : i64} {
  func.func @_img_embedder_kernel(%arg0: i32, %arg1: i32, %arg2: memref<16x128xbf16, #tpu.memory_space<vmem>>, %arg3: memref<128x512xbf16, #tpu.memory_space<vmem>>, %arg4: memref<1x512xf32, #tpu.memory_space<vmem>>, %arg5: memref<16x512xbf16, #tpu.memory_space<vmem>>) attributes {dimension_semantics = [#tpu.dimension_semantics<parallel>, #tpu.dimension_semantics<parallel>], iteration_bounds = array<i64: 1, 6>, scalar_prefetch = 0 : i64, scratch_operands = 0 : i64, tpu.core_type = #tpu.core_type<tc>, window_params = [{transform_indices = @transform_0, window_bounds = array<i64: 16, 128>}, {transform_indices = @transform_1, window_bounds = array<i64: 128, 512>}, {transform_indices = @transform_2, window_bounds = array<i64: 1, 512>}, {transform_indices = @transform_3, window_bounds = array<i64: 16, 512>}]} {
    %c0 = arith.constant 0 : index
    %c0_0 = arith.constant 0 : index
    %0 = vector.load %arg2[%c0, %c0_0] : memref<16x128xbf16, #tpu.memory_space<vmem>>, vector<16x128xbf16>
    %c0_1 = arith.constant 0 : index
    %c0_2 = arith.constant 0 : index
    %1 = vector.load %arg3[%c0_1, %c0_2] : memref<128x512xbf16, #tpu.memory_space<vmem>>, vector<128x512xbf16>
    %cst = arith.constant dense<0.000000e+00> : vector<16x512xf32>
    %2 = tpu.matmul %0, %1, %cst {dimension_numbers = #tpu.dot_dimension_numbers<[1], [0], [0], [1], [0, 0, 1, 1], [], []>} : vector<16x128xbf16>, vector<128x512xbf16>, vector<16x512xf32> -> vector<16x512xf32>
    %c0_3 = arith.constant 0 : index
    %c0_4 = arith.constant 0 : index
    %3 = vector.load %arg4[%c0_3, %c0_4] : memref<1x512xf32, #tpu.memory_space<vmem>>, vector<1x512xf32>
    %4 = vector.broadcast %3 : vector<1x512xf32> to vector<16x512xf32>
    %5 = arith.addf %2, %4 : vector<16x512xf32>
    %6 = arith.truncf %5 : vector<16x512xf32> to vector<16x512xbf16>
    %c0_5 = arith.constant 0 : index
    %c0_6 = arith.constant 0 : index
    %7 = vector.load %arg5[%c0_5, %c0_6] : memref<16x512xbf16, #tpu.memory_space<vmem>>, vector<16x512xbf16>
    tpu.vector_store %arg5[%c0_5, %c0_6], %6 {strides = array<i32>} : memref<16x512xbf16, #tpu.memory_space<vmem>>, vector<16x512xbf16>,
    return
  }
  func.func @transform_0(%arg0: i32, %arg1: i32) -> (i32, i32) {
    %c0_i32 = arith.constant 0 : i32
    %c0_i32_0 = arith.constant 0 : i32
    return %arg0, %c0_i32 : i32, i32
  }
  func.func @transform_1(%arg0: i32, %arg1: i32) -> (i32, i32) {
    %c0_i32 = arith.constant 0 : i32
    %c0_i32_0 = arith.constant 0 : i32
    return %c0_i32, %arg1 : i32, i32
  }
  func.func @transform_2(%arg0: i32, %arg1: i32) -> (i32, i32) {
    %c0_i32 = arith.constant 0 : i32
    %c0_i32_0 = arith.constant 0 : i32
    return %c0_i32, %arg1 : i32, i32
  }
  func.func @transform_3(%arg0: i32, %arg1: i32) -> (i32, i32) {
    %c0_i32 = arith.constant 0 : i32
    return %arg0, %arg1 : i32, i32
  }
}

</mosaic_0001>

<llo_original>
// kernel: img_embedder_forward.1
$region0: #{img_embedder_forward.1}
  #allocation0 [shape = 'u32[]', space=smem, size = 0x4, offset = 0x4, fixed_abs, tag = 'smem constant byte address 0x4 - core index']
  #allocation1 [shape = 'u32[144,128]{1,0:T(1,128)}', space=vmem, size = 0x12000, scoped, tag = 'internal scratch']
  %s0 = inlined_call_operand.vmem [shape: bf16[16,128], index: 0, kind: input, shape index: {}]
  %s1 = inlined_call_operand.vmem [shape: bf16[128,3072], index: 1, kind: input, shape index: {}]
  %s2 = inlined_call_operand.vmem [shape: f32[1,3072], index: 2, kind: input, shape index: {}]
  %s3 = inlined_call_operand.hbm [shape: bf16[16,3072], index: 3, kind: output, shape index: {}]
  %s4 = sld [smem:[#allocation0]]
  $region68: #{img_embedder_forward.1} parent=0
    _
  %s6 = ssub.s32 1, %s4
  %s7 = scalar_select 0, %s6, %s4
  $region1: #{img_embedder_forward.1} parent=0
    #allocation2 [shape = 'u8[262144]{0}', space=vmem, size = 0x40000, scoped, tag = 'input window, operand 1']
    #allocation3 [shape = 'u8[32768]{0}', space=vmem, size = 0x8000, scoped, tag = 'output window, operand 0']
    #allocation4 [shape = 's32[2]{0}', space=sflag, size = 0x8, scoped, tag = 'scoped memory for img_embedder_forward.1']
    %8 = vsyncpa [#allocation4], 0
    %s9 = scalar_lea.sflag [#allocation4], 1
    %10 = vsyncpa %s9, 0
    loop: start=0, step=1, limit=8
    $region2: #{img_embedder_forward.1} parent=1 // loop_pre_header
      _
    $region3: #{img_embedder_forward.1} parent=1 // loop_header
      %s12 = sphi 0, %s16
      %p13 = scmp.ge.s32.totalorder %s12, 8
      %s19 = sphi 0, %s31
      %s20 = sphi 0, %s27
      %s21 = sphi 0, %s19
      %s22 = sphi 0, %s20
      %s23 = sphi 0, %s21
      %s24 = sphi 0, %s22
      %s34 = sphi 0, %s36
      %s37 = sphi 0, %s34
      %s38 = sphi 0, %s37
      %s54 = sphi 0, %s38
      %s60 = sphi 0, %s62
      %s63 = sphi 0, %s60
      %s64 = sphi 0, %s63
      %s80 = sphi 0, %s64
      %s86 = sphi 0, %s88
      %s89 = sphi 0, %s86
      %s90 = sphi 0, %s89
      %s106 = sphi 0, %s90
      %s114 = sphi 0, %s116
      %s117 = sphi 0, %s114
      %s118 = sphi 0, %s117
      %s134 = sphi 0, %s118
    $region4: #{img_embedder_forward.1} parent=1 // loop_header_branch
      %15 = sbr.rel (%p13) target = $region8
    $region5: #{img_embedder_forward.1} parent=1 // loop_body
      %s17 = ssub.s32 %s12, 1
      %s18 = ssub.s32 %s12, 2
      %s25 = sadd.s32 1, %s20
      %p26 = scmp.ge.s32.totalorder %s25, 6
      %s27 = scalar_select %p26, 0, %s25
      %s28 = sadd.s32 1, %s19
      %s29 = scalar_select %p26, %s28, %s19
      %p30 = scmp.ge.s32.totalorder %s29, 1
      %s31 = scalar_select %p30, 0, %s29
      %s32 = ssub.s32 %s19, %s31
      %p33 = scmp.eq.s32.totalorder %s32, 0
      %s35 = sadd.s32 %s34, 1
      %s36 = scalar_select %p33, %s34, %s35
      %p39 = pneg %p33
      %p40 = scmp.eq.s32.totalorder %s12, 5
      %p41 = por %p39, %p40
      %p42 = scmp.ne.s32.totalorder %s34, %s37
      %p43 = scmp.eq.s32.totalorder %s12, 0
      %p44 = por %p42, %p43
      %p45 = scmp.ne.s32.totalorder %s34, %s37
      %p46 = scmp.eq.s32.totalorder %s17, 5
      %p47 = por %p45, %p46
      %p48 = scmp.ne.s32.totalorder %s37, %s38
      %p49 = scmp.eq.s32.totalorder %s17, 0
      %p50 = por %p48, %p49
      %p51 = scmp.ne.s32.totalorder %s37, %s38
      %p52 = scmp.eq.s32.totalorder %s18, 5
      %p53 = por %p51, %p52
      %p55 = scmp.ne.s32.totalorder %s38, %s54
      %p56 = scmp.eq.s32.totalorder %s18, 0
      %p57 = por %p55, %p56
      %s58 = ssub.s32 %s20, %s27
      %p59 = scmp.eq.s32.totalorder %s58, 0
      %s61 = sadd.s32 %s60, 1
      %s62 = scalar_select %p59, %s60, %s61
      %p65 = pneg %p59
      %p66 = scmp.eq.s32.totalorder %s12, 5
      %p67 = por %p65, %p66
      %p68 = scmp.ne.s32.totalorder %s60, %s63
      %p69 = scmp.eq.s32.totalorder %s12, 0
      %p70 = por %p68, %p69
      %p71 = scmp.ne.s32.totalorder %s60, %s63
      %p72 = scmp.eq.s32.totalorder %s17, 5
      %p73 = por %p71, %p72
      %p74 = scmp.ne.s32.totalorder %s63, %s64
      %p75 = scmp.eq.s32.totalorder %s17, 0
      %p76 = por %p74, %p75
      %p77 = scmp.ne.s32.totalorder %s63, %s64
      %p78 = scmp.eq.s32.totalorder %s18, 5
      %p79 = por %p77, %p78
      %p81 = scmp.ne.s32.totalorder %s64, %s80
      %p82 = scmp.eq.s32.totalorder %s18, 0
      %p83 = por %p81, %p82
      %s84 = ssub.s32 %s20, %s27
      %p85 = scmp.eq.s32.totalorder %s84, 0
      %s87 = sadd.s32 %s86, 1
      %s88 = scalar_select %p85, %s86, %s87
      %p91 = pneg %p85
      %p92 = scmp.eq.s32.totalorder %s12, 5
      %p93 = por %p91, %p92
      %p94 = scmp.ne.s32.totalorder %s86, %s89
      %p95 = scmp.eq.s32.totalorder %s12, 0
      %p96 = por %p94, %p95
      %p97 = scmp.ne.s32.totalorder %s86, %s89
      %p98 = scmp.eq.s32.totalorder %s17, 5
      %p99 = por %p97, %p98
      %p100 = scmp.ne.s32.totalorder %s89, %s90
      %p101 = scmp.eq.s32.totalorder %s17, 0
      %p102 = por %p100, %p101
      %p103 = scmp.ne.s32.totalorder %s89, %s90
      %p104 = scmp.eq.s32.totalorder %s18, 5
      %p105 = por %p103, %p104
      %p107 = scmp.ne.s32.totalorder %s90, %s106
      %p108 = scmp.eq.s32.totalorder %s18, 0
      %p109 = por %p107, %p108
      %s110 = ssub.s32 %s19, %s31
      %s111 = ssub.s32 %s20, %s27
      %s112 = sor.u32 %s110, %s111
      %p113 = scmp.eq.s32.totalorder %s112, 0
      %s115 = sadd.s32 %s114, 1
      %s116 = scalar_select %p113, %s114, %s115
      %p119 = pneg %p113
      %p120 = scmp.eq.s32.totalorder %s12, 5
      %p121 = por %p119, %p120
      %p122 = scmp.ne.s32.totalorder %s114, %s117
      %p123 = scmp.eq.s32.totalorder %s12, 0
      %p124 = por %p122, %p123
      %p125 = scmp.ne.s32.totalorder %s114, %s117
      %p126 = scmp.eq.s32.totalorder %s17, 5
      %p127 = por %p125, %p126
      %p128 = scmp.ne.s32.totalorder %s117, %s118
      %p129 = scmp.eq.s32.totalorder %s17, 0
      %p130 = por %p128, %p129
      %p131 = scmp.ne.s32.totalorder %s117, %s118
      %p132 = scmp.eq.s32.totalorder %s18, 5
      %p133 = por %p131, %p132
      %p135 = scmp.ne.s32.totalorder %s118, %s134
      %p136 = scmp.eq.s32.totalorder %s18, 0
      %p137 = por %p135, %p136
      %p138 = scmp.le.s32.totalorder 1, %s12
      %p139 = scmp.lt.s32.totalorder %s12, 7
      %p140 = pnand %p138, %p139
      %p141 = pneg %p140
      // Predicated region
      $region9: #{img_embedder_forward.1} parent=5 // pred_check
        _
      $region10: #{img_embedder_forward.1} parent=5 // pred_check_branch
        %143 = sbr.rel (%p140) target = $region12
      $region11: #{img_embedder_forward.1} parent=5 // pred_region
        %s144 = ssub.s32 %s12, 1
        // Predicated region
        $region13: #{img_embedder_forward.1} parent=11 // pred_check
          %p145 = pneg %p50
        $region14: #{img_embedder_forward.1} parent=11 // pred_check_branch
          %147 = sbr.rel (%p145) target = $region16
        $region15: #{img_embedder_forward.1} parent=11 // pred_region
          %s148 = smul.u32 2, %s21
          %p149 = scmp.lt.s32.totalorder %s148, 1
          %s150 = scalar_select %p149, %s148, 1
          %s151 = smul.addr %s150, 4
          %s152 = scalar_lea.vmem %s0, %s151
          %s153 = smul.u32 2, %s21
        $region16: #{img_embedder_forward.1} parent=11 // pred_fallthru
          _
      $region12: #{img_embedder_forward.1} parent=5 // pred_fallthru
        _
      %p154 = scmp.lt.s32.totalorder %s12, 6
      // Predicated region
      $region17: #{img_embedder_forward.1} parent=5 // pred_check
        %p155 = pneg %p154
      $region18: #{img_embedder_forward.1} parent=5 // pred_check_branch
        %157 = sbr.rel (%p155) target = $region20
      $region19: #{img_embedder_forward.1} parent=5 // pred_region
        // Predicated region
        $region21: #{img_embedder_forward.1} parent=19 // pred_check
          %p158 = pneg %p70
        $region22: #{img_embedder_forward.1} parent=19 // pred_check_branch
          %160 = sbr.rel (%p158) target = $region24
        $region23: #{img_embedder_forward.1} parent=19 // pred_region
          %s161 = sand.u32 %s60, 1
          %s162 = sand.u32 %s60, 1
          %s163 = smul.addr %s162, 256
          %s164 = scalar_lea.vmem [#allocation2], %s163
          %s165 = smul.u32 4, %s20
          %s166 = smul.addr %s165, 4
          %s167 = scalar_lea.vmem %s1, %s166
          // Predicated region
          $region25: #{img_embedder_forward.1} parent=23 // pred_check
            _
          $region26: #{img_embedder_forward.1} parent=23 // pred_check_branch
            %169 = sbr.rel (0) target = $region28
          $region27: #{img_embedder_forward.1} parent=23 // pred_region
            // Predicated region
            $region29: #{img_embedder_forward.1} parent=27 // pred_check
              _
            $region30: #{img_embedder_forward.1} parent=27 // pred_check_branch
              %171 = sbr.rel (0) target = $region32
            $region31: #{img_embedder_forward.1} parent=27 // pred_region
              loop: start=0, step=1, limit=1
              $region33: #{img_embedder_forward.1} parent=31 // loop_pre_header
                _
              $region34: #{img_embedder_forward.1} parent=31 // loop_header
                %s173 = sphi 0, %s177
                %p174 = scmp.ge.s32.totalorder %s173, 1
                %s178 = sphi %s167, %s167
                %s179 = sphi %s164, %s164
              $region35: #{img_embedder_forward.1} parent=31 // loop_header_branch
                %176 = sbr.rel (%p174) target = $region39
              $region36: #{img_embedder_forward.1} parent=31 // loop_body
                %v180 = vld [vmem:[%s178] sm:$0xff]
                %181 = vst [vmem:[%s179] sm:$0xff] %v180
                %v182 = vld [vmem:[%s178 + $0x8] sm:$0xff]
                %183 = vst [vmem:[%s179 + $0x8] sm:$0xff] %v182
                %v184 = vld [vmem:[%s178 + $0x60] sm:$0xff]
                %185 = vst [vmem:[%s179 + $0x10] sm:$0xff] %v184
                %v186 = vld [vmem:[%s178 + $0x68] sm:$0xff]
                %187 = vst [vmem:[%s179 + $0x18] sm:$0xff] %v186
                %v188 = vld [vmem:[%s178 + $0xc0] sm:$0xff]
                %189 = vst [vmem:[%s179 + $0x20] sm:$0xff] %v188
                %v190 = vld [vmem:[%s178 + $0xc8] sm:$0xff]
                %191 = vst [vmem:[%s179 + $0x28] sm:$0xff] %v190
                %v192 = vld [vmem:[%s178 + $0x120] sm:$0xff]
                %193 = vst [vmem:[%s179 + $0x30] sm:$0xff] %v192
                %v194 = vld [vmem:[%s178 + $0x128] sm:$0xff]
                %195 = vst [vmem:[%s179 + $0x38] sm:$0xff] %v194
                %v196 = vld [vmem:[%s178 + $0x180] sm:$0xff]
                %197 = vst [vmem:[%s179 + $0x40] sm:$0xff] %v196
                %v198 = vld [vmem:[%s178 + $0x188] sm:$0xff]
                %199 = vst [vmem:[%s179 + $0x48] sm:$0xff] %v198
                %v200 = vld [vmem:[%s178 + $0x1e0] sm:$0xff]
                %201 = vst [vmem:[%s179 + $0x50] sm:$0xff] %v200
                %v202 = vld [vmem:[%s178 + $0x1e8] sm:$0xff]
                %203 = vst [vmem:[%s179 + $0x58] sm:$0xff] %v202
                %v204 = vld [vmem:[%s178 + $0x240] sm:$0xff]
                %205 = vst [vmem:[%s179 + $0x60] sm:$0xff] %v204
                %v206 = vld [vmem:[%s178 + $0x248] sm:$0xff]
                %207 = vst [vmem:[%s179 + $0x68] sm:$0xff] %v206
                %v208 = vld [vmem:[%s178 + $0x2a0] sm:$0xff]
                %209 = vst [vmem:[%s179 + $0x70] sm:$0xff] %v208
                %v210 = vld [vmem:[%s178 + $0x2a8] sm:$0xff]
                %211 = vst [vmem:[%s179 + $0x78] sm:$0xff] %v210
                %v212 = vld [vmem:[%s178 + $0x300] sm:$0xff]
                %213 = vst [vmem:[%s179 + $0x80] sm:$0xff] %v212
                %v214 = vld [vmem:[%s178 + $0x308] sm:$0xff]
                %215 = vst [vmem:[%s179 + $0x88] sm:$0xff] %v214
                %v216 = vld [vmem:[%s178 + $0x360] sm:$0xff]
                %217 = vst [vmem:[%s179 + $0x90] sm:$0xff] %v216
                %v218 = vld [vmem:[%s178 + $0x368] sm:$0xff]
                %219 = vst [vmem:[%s179 + $0x98] sm:$0xff] %v218
                %v220 = vld [vmem:[%s178 + $0x3c0] sm:$0xff]
                %221 = vst [vmem:[%s179 + $0xa0] sm:$0xff] %v220
                %v222 = vld [vmem:[%s178 + $0x3c8] sm:$0xff]
                %223 = vst [vmem:[%s179 + $0xa8] sm:$0xff] %v222
                %v224 = vld [vmem:[%s178 + $0x420] sm:$0xff]
                %225 = vst [vmem:[%s179 + $0xb0] sm:$0xff] %v224
                %v226 = vld [vmem:[%s178 + $0x428] sm:$0xff]
                %227 = vst [vmem:[%s179 + $0xb8] sm:$0xff] %v226
                %v228 = vld [vmem:[%s178 + $0x480] sm:$0xff]
                %229 = vst [vmem:[%s179 + $0xc0] sm:$0xff] %v228
                %v230 = vld [vmem:[%s178 + $0x488] sm:$0xff]
                %231 = vst [vmem:[%s179 + $0xc8] sm:$0xff] %v230
                %v232 = vld [vmem:[%s178 + $0x4e0] sm:$0xff]
                %233 = vst [vmem:[%s179 + $0xd0] sm:$0xff] %v232
                %v234 = vld [vmem:[%s178 + $0x4e8] sm:$0xff]
                %235 = vst [vmem:[%s179 + $0xd8] sm:$0xff] %v234
                %v236 = vld [vmem:[%s178 + $0x540] sm:$0xff]
                %237 = vst [vmem:[%s179 + $0xe0] sm:$0xff] %v236
                %v238 = vld [vmem:[%s178 + $0x548] sm:$0xff]
                %239 = vst [vmem:[%s179 + $0xe8] sm:$0xff] %v238
                %v240 = vld [vmem:[%s178 + $0x5a0] sm:$0xff]
                %241 = vst [vmem:[%s179 + $0xf0] sm:$0xff] %v240
                %v242 = vld [vmem:[%s178 + $0x5a8] sm:$0xff]
                %243 = vst [vmem:[%s179 + $0xf8] sm:$0xff] %v242
              $region37: #{img_embedder_forward.1} parent=31 // loop_footer
                %s177 = sadd.s32 1, %s173
              $region38: #{img_embedder_forward.1} parent=31 // loop_footer_branch
                %172 = sbr.rel target = $region34
              $region39: #{img_embedder_forward.1} parent=31 // loop_exit
                _
            $region32: #{img_embedder_forward.1} parent=27 // pred_fallthru
              _
            // Predicated region
            $region40: #{img_embedder_forward.1} parent=27 // pred_check
              _
            $region41: #{img_embedder_forward.1} parent=27 // pred_check_branch
              %245 = sbr.rel target = $region43
            $region42: #{img_embedder_forward.1} parent=27 // pred_region
              _
            $region43: #{img_embedder_forward.1} parent=27 // pred_fallthru
              _
          $region28: #{img_embedder_forward.1} parent=23 // pred_fallthru
            _
          %246 = vnop
        $region24: #{img_embedder_forward.1} parent=19 // pred_fallthru
          _
        // Predicated region
        $region44: #{img_embedder_forward.1} parent=19 // pred_check
          %p247 = pneg %p96
        $region45: #{img_embedder_forward.1} parent=19 // pred_check_branch
          %249 = sbr.rel (%p247) target = $region47
        $region46: #{img_embedder_forward.1} parent=19 // pred_region
          %s250 = smul.u32 4, %s20
          %p251 = scmp.lt.s32.totalorder %s250, 23
          %s252 = scalar_select %p251, %s250, 23
          %s253 = scalar_lea.vmem %s2, %s252
          %s254 = smul.u32 4, %s20
        $region47: #{img_embedder_forward.1} parent=19 // pred_fallthru
          _
      $region20: #{img_embedder_forward.1} parent=5 // pred_fallthru
        _
      %p255 = scmp.le.s32.totalorder 1, %s12
      %p256 = scmp.lt.s32.totalorder %s12, 7
      %p257 = pnand %p255, %p256
      %p258 = pneg %p257
      // Predicated region
      $region48: #{img_embedder_forward.1} parent=5 // pred_check
        _
      $region49: #{img_embedder_forward.1} parent=5 // pred_check_branch
        %260 = sbr.rel (%p257) target = $region51
      $region50: #{img_embedder_forward.1} parent=5 // pred_region
        %s261 = ssub.s32 %s12, 1
        %s262 = sand.u32 %s63, 1
        %s263 = sand.u32 %s63, 1
        %s264 = smul.addr %s263, 256
        %s265 = scalar_lea.vmem [#allocation2], %s264
        // Predicated region
        $region52: #{img_embedder_forward.1} parent=50 // pred_check
          %p266 = pneg %p76
        $region53: #{img_embedder_forward.1} parent=50 // pred_check_branch
          %268 = sbr.rel (%p266) target = $region55
        $region54: #{img_embedder_forward.1} parent=50 // pred_region
          _
        $region55: #{img_embedder_forward.1} parent=50 // pred_fallthru
          _
        %s269 = smul.u32 2, %s21
        %p270 = scmp.lt.s32.totalorder %s269, 1
        %s271 = scalar_select %p270, %s269, 1
        %s272 = smul.addr %s271, 4
        %s273 = scalar_lea.vmem %s0, %s272
        %p274 = pneg %p50
        %p275 = pneg %p47
        %s276 = sand.u32 %s63, 1
        %s277 = sand.u32 %s63, 1
        %s278 = smul.addr %s277, 256
        %s279 = scalar_lea.vmem [#allocation2], %s278
        %p280 = pneg %p76
        %p281 = pneg %p73
        %s282 = smul.u32 4, %s22
        %p283 = scmp.lt.s32.totalorder %s282, 23
        %s284 = scalar_select %p283, %s282, 23
        %s285 = scalar_lea.vmem %s2, %s284
        %p286 = pneg %p102
        %p287 = pneg %p99
        %p288 = pneg %p130
        %p289 = pneg %p127
        %s290 = sand.u32 %s117, 1
        %s291 = scalar_lea.sflag [#allocation4], %s290
        %s292 = sand.u32 %s117, 1
        %s293 = smul.addr %s292, 32
        %s294 = scalar_lea.vmem [#allocation3], %s293
        %s295 = smul.u32 2, %s21
        %p296 = scmp.lt.s32.totalorder %s295, 1
        %s297 = scalar_select %p296, %s295, 1
        %s298 = smul.addr %s297, 4
        %s299 = scalar_lea.vmem %s0, %s298
        %s300 = smul.u32 2, %s21
        %s301 = smul.u32 4, %s22
        %s302 = smul.u32 4, %s22
        %p303 = scmp.lt.s32.totalorder %s302, 23
        %s304 = scalar_select %p303, %s302, 23
        %s305 = scalar_lea.vmem %s2, %s304
        %s306 = smul.u32 4, %s22
        %s307 = smul.u32 2, %s21
        %s308 = smul.u32 4, %s22
        %v310 = vld [vmem:[%s299] sm:$0xf]
        %v311 = vld [vmem:[%s299 + $0x4] sm:$0xf]
        %v312 = vld [vmem:[%s265] sm:$0xff]
        %v313 = vld [vmem:[%s265 + $0x8] sm:$0xff]
        %v314 = vld [vmem:[%s265 + $0x10] sm:$0xff]
        %v315 = vld [vmem:[%s265 + $0x18] sm:$0xff]
        %v316 = vld [vmem:[%s265 + $0x20] sm:$0xff]
        %v317 = vld [vmem:[%s265 + $0x28] sm:$0xff]
        %v318 = vld [vmem:[%s265 + $0x30] sm:$0xff]
        %v319 = vld [vmem:[%s265 + $0x38] sm:$0xff]
        %v320 = vld [vmem:[%s265 + $0x40] sm:$0xff]
        %v321 = vld [vmem:[%s265 + $0x48] sm:$0xff]
        %v322 = vld [vmem:[%s265 + $0x50] sm:$0xff]
        %v323 = vld [vmem:[%s265 + $0x58] sm:$0xff]
        %v324 = vld [vmem:[%s265 + $0x60] sm:$0xff]
        %v325 = vld [vmem:[%s265 + $0x68] sm:$0xff]
        %v326 = vld [vmem:[%s265 + $0x70] sm:$0xff]
        %v327 = vld [vmem:[%s265 + $0x78] sm:$0xff]
        %v328 = vld [vmem:[%s265 + $0x80] sm:$0xff]
        %v329 = vld [vmem:[%s265 + $0x88] sm:$0xff]
        %v330 = vld [vmem:[%s265 + $0x90] sm:$0xff]
        %v331 = vld [vmem:[%s265 + $0x98] sm:$0xff]
        %v332 = vld [vmem:[%s265 + $0xa0] sm:$0xff]
        %v333 = vld [vmem:[%s265 + $0xa8] sm:$0xff]
        %v334 = vld [vmem:[%s265 + $0xb0] sm:$0xff]
        %v335 = vld [vmem:[%s265 + $0xb8] sm:$0xff]
        %v336 = vld [vmem:[%s265 + $0xc0] sm:$0xff]
        %v337 = vld [vmem:[%s265 + $0xc8] sm:$0xff]
        %v338 = vld [vmem:[%s265 + $0xd0] sm:$0xff]
        %v339 = vld [vmem:[%s265 + $0xd8] sm:$0xff]
        %v340 = vld [vmem:[%s265 + $0xe0] sm:$0xff]
        %v341 = vld [vmem:[%s265 + $0xe8] sm:$0xff]
        %v342 = vld [vmem:[%s265 + $0xf0] sm:$0xff]
        %v343 = vld [vmem:[%s265 + $0xf8] sm:$0xff]
        %v344 = vld [vmem:[%s305] sm:$0xf]
        %v346 = vlaneseq
        %v347 = vshrl.u32 %v346, 7
        %v348 = vsub.s32 0, %v347
        %v349 = vrot.slane %v344, %v348
        %v350 = vlaneseq
        %v351 = vshrl.u32 %v350, 7
        %v352 = vsub.s32 1, %v351
        %v353 = vrot.slane %v344, %v352
        %v354 = vlaneseq
        %v355 = vshrl.u32 %v354, 7
        %v356 = vsub.s32 2, %v355
        %v357 = vrot.slane %v344, %v356
        %v358 = vlaneseq
        %v359 = vshrl.u32 %v358, 7
        %v360 = vsub.s32 3, %v359
        %v361 = vrot.slane %v344, %v360
        %v368 = vunpack.c.l.b16 %v310
        %v369 = vunpack.c.l.b16 %v311
        %v370 = vpack.c.b16 %v369, %v368
        %v404 = vunpack.c.l.b16 %v312
        %v405 = vunpack.c.h.b16 %v312
        %v406 = vunpack.c.l.b16 %v313
        %v407 = vunpack.c.h.b16 %v313
        %v408 = vunpack.c.l.b16 %v314
        %v409 = vunpack.c.h.b16 %v314
        %v410 = vunpack.c.l.b16 %v315
        %v411 = vunpack.c.h.b16 %v315
        %v412 = vunpack.c.l.b16 %v316
        %v413 = vunpack.c.h.b16 %v316
        %v414 = vunpack.c.l.b16 %v317
        %v415 = vunpack.c.h.b16 %v317
        %v416 = vunpack.c.l.b16 %v318
        %v417 = vunpack.c.h.b16 %v318
        %v418 = vunpack.c.l.b16 %v319
        %v419 = vunpack.c.h.b16 %v319
        %v420 = vunpack.c.l.b16 %v320
        %v421 = vunpack.c.h.b16 %v320
        %v422 = vunpack.c.l.b16 %v321
        %v423 = vunpack.c.h.b16 %v321
        %v424 = vunpack.c.l.b16 %v322
        %v425 = vunpack.c.h.b16 %v322
        %v426 = vunpack.c.l.b16 %v323
        %v427 = vunpack.c.h.b16 %v323
        %v428 = vunpack.c.l.b16 %v324
        %v429 = vunpack.c.h.b16 %v324
        %v430 = vunpack.c.l.b16 %v325
        %v431 = vunpack.c.h.b16 %v325
        %v432 = vunpack.c.l.b16 %v326
        %v433 = vunpack.c.h.b16 %v326
        %v434 = vunpack.c.l.b16 %v327
        %v435 = vunpack.c.h.b16 %v327
        %v436 = vunpack.c.l.b16 %v328
        %v437 = vunpack.c.h.b16 %v328
        %v438 = vunpack.c.l.b16 %v329
        %v439 = vunpack.c.h.b16 %v329
        %v440 = vunpack.c.l.b16 %v330
        %v441 = vunpack.c.h.b16 %v330
        %v442 = vunpack.c.l.b16 %v331
        %v443 = vunpack.c.h.b16 %v331
        %v444 = vunpack.c.l.b16 %v332
        %v445 = vunpack.c.h.b16 %v332
        %v446 = vunpack.c.l.b16 %v333
        %v447 = vunpack.c.h.b16 %v333
        %v448 = vunpack.c.l.b16 %v334
        %v449 = vunpack.c.h.b16 %v334
        %v450 = vunpack.c.l.b16 %v335
        %v451 = vunpack.c.h.b16 %v335
        %v452 = vunpack.c.l.b16 %v336
        %v453 = vunpack.c.h.b16 %v336
        %v454 = vunpack.c.l.b16 %v337
        %v455 = vunpack.c.h.b16 %v337
        %v456 = vunpack.c.l.b16 %v338
        %v457 = vunpack.c.h.b16 %v338
        %v458 = vunpack.c.l.b16 %v339
        %v459 = vunpack.c.h.b16 %v339
        %v460 = vunpack.c.l.b16 %v340
        %v461 = vunpack.c.h.b16 %v340
        %v462 = vunpack.c.l.b16 %v341
        %v463 = vunpack.c.h.b16 %v341
        %v464 = vunpack.c.l.b16 %v342
        %v465 = vunpack.c.h.b16 %v342
        %v466 = vunpack.c.l.b16 %v343
        %v467 = vunpack.c.h.b16 %v343
        %v468 = vpack.c.b16 %v408, %v404
        %v469 = vpack.c.b16 %v409, %v405
        %v470 = vpack.c.b16 %v410, %v406
        %v471 = vpack.c.b16 %v411, %v407
        %v472 = vpack.c.b16 %v416, %v412
        %v473 = vpack.c.b16 %v417, %v413
        %v474 = vpack.c.b16 %v418, %v414
        %v475 = vpack.c.b16 %v419, %v415
        %v476 = vpack.c.b16 %v424, %v420
        %v477 = vpack.c.b16 %v425, %v421
        %v478 = vpack.c.b16 %v426, %v422
        %v479 = vpack.c.b16 %v427, %v423
        %v480 = vpack.c.b16 %v432, %v428
        %v481 = vpack.c.b16 %v433, %v429
        %v482 = vpack.c.b16 %v434, %v430
        %v483 = vpack.c.b16 %v435, %v431
        %v484 = vpack.c.b16 %v440, %v436
        %v485 = vpack.c.b16 %v441, %v437
        %v486 = vpack.c.b16 %v442, %v438
        %v487 = vpack.c.b16 %v443, %v439
        %v488 = vpack.c.b16 %v448, %v444
        %v489 = vpack.c.b16 %v449, %v445
        %v490 = vpack.c.b16 %v450, %v446
        %v491 = vpack.c.b16 %v451, %v447
        %v492 = vpack.c.b16 %v456, %v452
        %v493 = vpack.c.b16 %v457, %v453
        %v494 = vpack.c.b16 %v458, %v454
        %v495 = vpack.c.b16 %v459, %v455
        %v496 = vpack.c.b16 %v464, %v460
        %v497 = vpack.c.b16 %v465, %v461
        %v498 = vpack.c.b16 %v466, %v462
        %v499 = vpack.c.b16 %v467, %v463
        %532 = vmatprep.subr.bf16.mxu0 %v497
        %533 = vmatpush1.bf16.msra.mxu0 %v496
        %534 = vmatprep.subr.bf16.mxu0 %v493
        %535 = vmatpush1.bf16.msra.mxu0 %v492
        %536 = vmatprep.subr.bf16.mxu0 %v489
        %537 = vmatpush1.bf16.msra.mxu0 %v488
        %538 = vmatprep.subr.bf16.mxu0 %v485
        %539 = vmatpush1.bf16.msra.mxu0 %v484
        %540 = vmatprep.subr.bf16.mxu0 %v481
        %541 = vmatpush1.bf16.msra.mxu0 %v480
        %542 = vmatprep.subr.bf16.mxu0 %v477
        %543 = vmatpush1.bf16.msra.mxu0 %v476
        %544 = vmatprep.subr.bf16.mxu0 %v473
        %545 = vmatpush1.bf16.msra.mxu0 %v472
        %546 = vmatprep.subr.bf16.mxu0 %v469
        %547 = vmatpush1.bf16.msra.mxu0 %v468
        %548 = vmatprep.subr.bf16.mxu0 0
        %549 = vmatpush2.bf16.msra.mxu0 0
        %550 = vmatprep.subr.bf16.mxu0 0
        %551 = vmatpush2.bf16.msra.mxu0 0
        %552 = vmatprep.subr.bf16.mxu0 0
        %553 = vmatpush2.bf16.msra.mxu0 0
        %554 = vmatprep.subr.bf16.mxu0 0
        %555 = vmatpush2.bf16.msra.mxu0 0
        %556 = vmatprep.subr.bf16.mxu0 0
        %557 = vmatpush2.bf16.msra.mxu0 0
        %558 = vmatprep.subr.bf16.mxu0 0
        %559 = vmatpush2.bf16.msra.mxu0 0
        %560 = vmatprep.subr.bf16.mxu0 0
        %561 = vmatpush2.bf16.msra.mxu0 0
        %562 = vmatprep.subr.bf16.mxu0 0
        %563 = vmatpush2.bf16.msra.mxu0 0
        %564 = vmatprep.mubr.bf16.mxu0 0
        %565 = vmatmul.mubr.bf16.gmra.mxu0 %v370
        %v566 = vpop.f32.mrf.mxu0
        %v567 = vadd.f32 %v349, %v566
        %v568 = vpop.f32.mrf.mxu0
        %v569 = vadd.f32 %v353, %v568
        %v570 = vpop.f32.mrf.mxu0
        %v571 = vadd.f32 %v349, %v570
        %v572 = vpop.f32.mrf.mxu0
        %v573 = vadd.f32 %v353, %v572
        %574 = vdwg.mxu0
        %575 = vmatprep.subr.bf16.mxu0 %v499
        %576 = vmatpush1.bf16.msra.mxu0 %v498
        %577 = vmatprep.subr.bf16.mxu0 %v495
        %578 = vmatpush1.bf16.msra.mxu0 %v494
        %579 = vmatprep.subr.bf16.mxu0 %v491
        %580 = vmatpush1.bf16.msra.mxu0 %v490
        %581 = vmatprep.subr.bf16.mxu0 %v487
        %582 = vmatpush1.bf16.msra.mxu0 %v486
        %583 = vmatprep.subr.bf16.mxu0 %v483
        %584 = vmatpush1.bf16.msra.mxu0 %v482
        %585 = vmatprep.subr.bf16.mxu0 %v479
        %586 = vmatpush1.bf16.msra.mxu0 %v478
        %587 = vmatprep.subr.bf16.mxu0 %v475
        %588 = vmatpush1.bf16.msra.mxu0 %v474
        %589 = vmatprep.subr.bf16.mxu0 %v471
        %590 = vmatpush1.bf16.msra.mxu0 %v470
        %591 = vmatprep.subr.bf16.mxu0 0
        %592 = vmatpush2.bf16.msra.mxu0 0
        %593 = vmatprep.subr.bf16.mxu0 0
        %594 = vmatpush2.bf16.msra.mxu0 0
        %595 = vmatprep.subr.bf16.mxu0 0
        %596 = vmatpush2.bf16.msra.mxu0 0
        %597 = vmatprep.subr.bf16.mxu0 0
        %598 = vmatpush2.bf16.msra.mxu0 0
        %599 = vmatprep.subr.bf16.mxu0 0
        %600 = vmatpush2.bf16.msra.mxu0 0
        %601 = vmatprep.subr.bf16.mxu0 0
        %602 = vmatpush2.bf16.msra.mxu0 0
        %603 = vmatprep.subr.bf16.mxu0 0
        %604 = vmatpush2.bf16.msra.mxu0 0
        %605 = vmatprep.subr.bf16.mxu0 0
        %606 = vmatpush2.bf16.msra.mxu0 0
        %607 = vmatprep.mubr.bf16.mxu0 0
        %608 = vmatmul.mubr.bf16.gmra.mxu0 %v370
        %v609 = vpop.f32.mrf.mxu0
        %v610 = vadd.f32 %v357, %v609
        %v611 = vpop.f32.mrf.mxu0
        %v612 = vadd.f32 %v361, %v611
        %v613 = vpop.f32.mrf.mxu0
        %v614 = vadd.f32 %v357, %v613
        %v615 = vpop.f32.mrf.mxu0
        %v616 = vadd.f32 %v361, %v615
        %617 = vdwg.mxu0
        %v618 = vpack.c.bf16 %v571, %v567
        %v619 = vpack.c.bf16 %v573, %v569
        %v620 = vpack.c.bf16 %v614, %v610
        %v621 = vpack.c.bf16 %v616, %v612
        %v626 = vunpack.c.l.b16 %v618
        %v627 = vunpack.c.l.b16 %v619
        %v628 = vunpack.c.l.b16 %v620
        %v629 = vunpack.c.l.b16 %v621
        %v630 = vunpack.c.h.b16 %v618
        %v631 = vunpack.c.h.b16 %v619
        %v632 = vunpack.c.h.b16 %v620
        %v633 = vunpack.c.h.b16 %v621
        %v634 = vpack.c.b16 %v627, %v626
        %v635 = vpack.c.b16 %v629, %v628
        %v636 = vpack.c.b16 %v631, %v630
        %v637 = vpack.c.b16 %v633, %v632
        %642 = vst [vmem:[%s294] sm:$0xff] %v634
        %643 = vst [vmem:[%s294 + $0x8] sm:$0xff] %v635
        %644 = vst [vmem:[%s294 + $0x10] sm:$0xff] %v636
        %645 = vst [vmem:[%s294 + $0x18] sm:$0xff] %v637
        %s646 = sand.u32 %s117, 1
        %s647 = scalar_lea.sflag [#allocation4], %s646
        %s648 = sand.u32 %s117, 1
        %s649 = smul.addr %s648, 32
        %s650 = scalar_lea.vmem [#allocation3], %s649
        // Predicated region
        $region56: #{img_embedder_forward.1} parent=50 // pred_check
          %p651 = pneg %p127
        $region57: #{img_embedder_forward.1} parent=50 // pred_check_branch
          %653 = sbr.rel (%p651) target = $region59
        $region58: #{img_embedder_forward.1} parent=50 // pred_region
          %s654 = smul.u32 2, %s21
          %s655 = smul.u32 4, %s22
          %s657 = ssub.s32 512, 512
          %658 = vsyncadd %s647, %s657
          %s659 = smul.addr %s654, 24
          %s660 = sadd.s32 %s655, %s659
          %s661 = smul.addr %s660, 64
          %s662 = scalar_lea.hbm %s3, %s661
          %s663 = sshll.u32 %s650, 4
          %s664 = int_to_ptr.vmem [resolvable:$true] %s663
          %669 = dma.vmem_to_hbm [thread:$0]  %s664, 512, %s662, %s647, 256, 1536, 16
        $region59: #{img_embedder_forward.1} parent=50 // pred_fallthru
          _
      $region51: #{img_embedder_forward.1} parent=5 // pred_fallthru
        _
      %p670 = scmp.le.s32.totalorder 2, %s12
      // Predicated region
      $region60: #{img_embedder_forward.1} parent=5 // pred_check
        %p671 = pneg %p670
      $region61: #{img_embedder_forward.1} parent=5 // pred_check_branch
        %673 = sbr.rel (%p671) target = $region63
      $region62: #{img_embedder_forward.1} parent=5 // pred_region
        %s674 = ssub.s32 %s12, 2
        // Predicated region
        $region64: #{img_embedder_forward.1} parent=62 // pred_check
          %p675 = pneg %p133
        $region65: #{img_embedder_forward.1} parent=62 // pred_check_branch
          %677 = sbr.rel (%p675) target = $region67
        $region66: #{img_embedder_forward.1} parent=62 // pred_region
          %s678 = sand.u32 %s118, 1
          %s679 = scalar_lea.sflag [#allocation4], %s678
          %s680 = sand.u32 %s118, 1
          %s681 = smul.addr %s680, 32
          %s682 = scalar_lea.vmem [#allocation3], %s681
          %683 = dma.done %s679, 512
        $region67: #{img_embedder_forward.1} parent=62 // pred_fallthru
          _
      $region63: #{img_embedder_forward.1} parent=5 // pred_fallthru
        _
    $region6: #{img_embedder_forward.1} parent=1 // loop_footer
      %s16 = sadd.s32 1, %s12
    $region7: #{img_embedder_forward.1} parent=1 // loop_footer_branch
      %11 = sbr.rel target = $region3
    $region8: #{img_embedder_forward.1} parent=1 // loop_exit
      _
    %684 = vsyncpa [#allocation4], 1
    %s685 = scalar_lea.sflag [#allocation4], 1
    %686 = vsyncpa %s685, 1

</llo_original>
